<compile_context>
chip_gen: v7x
topology: tpu7x:2x2x1
jax: 0.10.0
libtpu: 0.0.40
codegen_flags: <defaults>
</compile_context>

<pallas_src>
import functools

import jax
import jax.numpy as jnp
from jax.experimental import pallas as pl
from jax.experimental.pallas import tpu as pltpu


def _triplet_loss_kernel(lab_smem_ref, x_ref, lab_row_ref, lab_col_ref,
                         tot_ref, cnt_ref, *, margin, n):
    x = x_ref[...].astype(jnp.float32)          # (N, D)  cast in-register
    lab_row = lab_row_ref[...]                  # (1, N) int32
    lab_col = lab_col_ref[...]                  # (N, 1) int32

    # --- L2 normalize (F.normalize, eps = 1e-12) using rsqrt on the EUP ---
    sq = jnp.sum(x * x, axis=-1, keepdims=True)                  # (N, 1)
    xn = x * jax.lax.rsqrt(jnp.maximum(sq, 1e-24))               # (N, D)

    # --- pairwise Euclidean distances; unit-norm => d^2 = 2 - 2 * <xi, xj> ---
    gram = jax.lax.dot_general(
        xn, xn, (((1,), (1,)), ((), ())),
        preferred_element_type=jnp.float32)                      # (N, N)
    dist = jnp.sqrt(jnp.maximum(2.0 - 2.0 * gram, 0.0))          # (N, N)

    iota_col = jax.lax.broadcasted_iota(jnp.int32, (n, 1), 0)    # (N, 1)
    iota_row = jax.lax.broadcasted_iota(jnp.int32, (1, n), 1)    # (1, N)

    def body(a, carry):
        acc_loss, acc_cnt = carry
        la = lab_smem_ref[a]                                     # scalar label[a] (SMEM)

        # Exact row/column extraction of dist via one-hot matmuls (idle MXU slot);
        # avoids lane-crossing column slices inside the loop.
        oh_col = (iota_col == a).astype(jnp.float32)             # (N, 1)
        oh_row = (iota_row == a).astype(jnp.float32)             # (1, N)
        ap_col = jax.lax.dot_general(                            # (N, 1) = dist[:, a]
            dist, oh_col, (((1,), (0,)), ((), ())),
            preferred_element_type=jnp.float32)
        an_row = jax.lax.dot_general(                            # (1, N) = dist[a, :]
            oh_row, dist, (((1,), (0,)), ((), ())),
            preferred_element_type=jnp.float32)

        pos_col = (lab_col == la) & (iota_col != a)              # (N, 1) valid positives
        neg_row = lab_row != la                                  # (1, N) valid negatives

        tmarg = an_row - ap_col                                  # (N, N): d(a,n) - d(a,p)
        nz = pos_col & neg_row & (tmarg > 0.0) & (tmarg < margin)
        acc_loss = acc_loss + jnp.where(nz, margin - tmarg, 0.0)
        acc_cnt = acc_cnt + jnp.where(nz, 1.0, 0.0)
        return acc_loss, acc_cnt

    zero = jnp.zeros((n, n), jnp.float32)
    acc_loss, acc_cnt = jax.lax.fori_loop(0, n, body, (zero, zero))

    # Single cross-lane reduction after the loop; scalars out via SMEM.
    tot_ref[0, 0] = jnp.sum(acc_loss)
    cnt_ref[0, 0] = jnp.sum(acc_cnt)


def triplet_loss(embeddings, labels, margin=0.1):
    n, d = embeddings.shape
    labels = labels.astype(jnp.int32)
    lab_row = labels.reshape(1, n)
    lab_col = labels.reshape(n, 1)
    kernel = functools.partial(_triplet_loss_kernel, margin=float(margin), n=n)

    tot, cnt = pl.pallas_call(
        kernel,
        grid_spec=pltpu.PrefetchScalarGridSpec(
            num_scalar_prefetch=1,                    # labels -> SMEM for scalar reads
            grid=(1,),
            in_specs=[
                pl.BlockSpec((n, d), lambda i, lab: (0, 0)),
                pl.BlockSpec((1, n), lambda i, lab: (0, 0)),
                pl.BlockSpec((n, 1), lambda i, lab: (0, 0)),
            ],
            out_specs=[
                pl.BlockSpec(memory_space=pltpu.MemorySpace.SMEM),
                pl.BlockSpec(memory_space=pltpu.MemorySpace.SMEM),
            ],
        ),
        out_shape=(jax.ShapeDtypeStruct((1, 1), jnp.float32),
                   jax.ShapeDtypeStruct((1, 1), jnp.float32)),
        compiler_params=pltpu.CompilerParams(
            dimension_semantics=("arbitrary",),
            vmem_limit_bytes=32 * 1024 * 1024),
    )(labels, embeddings, lab_row, lab_col)

    tot_s = tot[0, 0]
    cnt_s = cnt[0, 0]
    # AvgNonZeroReducer finalization (done in the wrapper, outside the kernel).
    return jnp.where(cnt_s > 0.0, tot_s / jnp.maximum(cnt_s, 1.0), 0.0)


def ref_triplet_loss(embeddings, labels, margin=0.1):
    """Pure-JAX reference reproducing pytorch-metric-learning semantics."""
    x = embeddings.astype(jnp.float32)
    xn = x / jnp.maximum(jnp.linalg.norm(x, axis=1, keepdims=True), 1e-12)
    diff = xn[:, None, :] - xn[None, :, :]
    dist = jnp.sqrt(jnp.maximum(jnp.sum(diff * diff, axis=-1), 0.0))
    same = labels[:, None] == labels[None, :]
    n = x.shape[0]
    eye = jnp.eye(n, dtype=bool)
    ap = dist[:, :, None]                      # (a, p, 1)
    an = dist[:, None, :]                      # (a, 1, n)
    tmarg = an - ap
    valid = (same & ~eye)[:, :, None] & (~same)[:, None, :]
    sel = valid & (tmarg > 0.0) & (tmarg <= margin)
    per_loss = jnp.maximum(margin - tmarg, 0.0)
    nz = sel & (per_loss > 0.0)
    tot = jnp.sum(jnp.where(nz, per_loss, 0.0))
    cnt = jnp.sum(nz)
    return jnp.where(cnt > 0, tot / jnp.maximum(cnt, 1), 0.0)


if __name__ == "__main__":
    key = jax.random.PRNGKey(0)
    kx, kl = jax.random.split(key)
    N, D = 16, 32
    margin = 0.1  # module default

    embeddings = jax.random.normal(kx, (N, D), dtype=jnp.float32)
    labels = jax.random.randint(kl, (N,), 0, 3, dtype=jnp.int32)

    loss = triplet_loss(embeddings, labels, margin=margin)
    loss = jax.block_until_ready(loss)

    ref = ref_triplet_loss(embeddings, labels, margin=margin)
    assert jnp.allclose(loss, ref, atol=1e-5), (float(loss), float(ref))
    print("KERNEL_OK")
</pallas_src>

<mosaic_0001>
module attributes {stable_mosaic.version = 11 : i64} {
  func.func @_triplet_loss_kernel(%arg0: i32, %arg1: memref<16xi32, #tpu.memory_space<smem>>, %arg2: memref<16x32xf32, #tpu.memory_space<vmem>>, %arg3: memref<1x16xi32, #tpu.memory_space<vmem>>, %arg4: memref<16x1xi32, #tpu.memory_space<vmem>>, %arg5: memref<1x1xf32, #tpu.memory_space<smem>>, %arg6: memref<1x1xf32, #tpu.memory_space<smem>>) attributes {dimension_semantics = [#tpu.dimension_semantics<arbitrary>], iteration_bounds = array<i64: 1>, scalar_prefetch = 1 : i64, scratch_operands = 0 : i64, tpu.core_type = #tpu.core_type<tc>, window_params = [{pipeline_mode = #tpu.pipeline_mode<synchronous>, transform_indices = @transform_0, window_bounds = array<i64: 16, 32>}, {pipeline_mode = #tpu.pipeline_mode<synchronous>, transform_indices = @transform_1, window_bounds = array<i64: 1, 16>}, {pipeline_mode = #tpu.pipeline_mode<synchronous>, transform_indices = @transform_2, window_bounds = array<i64: 16, 1>}, {transform_indices = @transform_3, window_bounds = array<i64: 1, 1>}, {transform_indices = @transform_4, window_bounds = array<i64: 1, 1>}]} {
    %c0 = arith.constant 0 : index
    %c0_0 = arith.constant 0 : index
    %0 = vector.load %arg2[%c0, %c0_0] : memref<16x32xf32, #tpu.memory_space<vmem>>, vector<16x32xf32>
    %c0_1 = arith.constant 0 : index
    %c0_2 = arith.constant 0 : index
    %1 = vector.load %arg3[%c0_1, %c0_2] : memref<1x16xi32, #tpu.memory_space<vmem>>, vector<1x16xi32>
    %c0_3 = arith.constant 0 : index
    %c0_4 = arith.constant 0 : index
    %2 = vector.load %arg4[%c0_3, %c0_4] : memref<16x1xi32, #tpu.memory_space<vmem>>, vector<16x1xi32>
    %3 = arith.mulf %0, %0 : vector<16x32xf32>
    %cst = arith.constant dense<0.000000e+00> : vector<16xf32>
    %4 = vector.multi_reduction <add>, %3, %cst [1] : vector<16x32xf32> to vector<16xf32>
    %5 = vector.shape_cast %4 : vector<16xf32> to vector<16x1xf32>
    %cst_5 = arith.constant 1.000000e-24 : f32
    %6 = vector.broadcast %cst_5 : f32 to vector<16x1xf32>
    %7 = arith.maximumf %5, %6 : vector<16x1xf32>
    %8 = math.rsqrt %7 : vector<16x1xf32>
    %9 = vector.broadcast %8 : vector<16x1xf32> to vector<16x32xf32>
    %10 = arith.mulf %0, %9 : vector<16x32xf32>
    %cst_6 = arith.constant dense<0.000000e+00> : vector<16x16xf32>
    %11 = tpu.matmul %10, %10, %cst_6 {dimension_numbers = #tpu.dot_dimension_numbers<[1], [1], [0], [0], [0, 0, 1, 0], [], []>} : vector<16x32xf32>, vector<16x32xf32>, vector<16x16xf32> -> vector<16x16xf32>
    %cst_7 = arith.constant 2.000000e+00 : f32
    %12 = vector.broadcast %cst_7 : f32 to vector<16x16xf32>
    %13 = arith.mulf %12, %11 : vector<16x16xf32>
    %cst_8 = arith.constant 2.000000e+00 : f32
    %14 = vector.broadcast %cst_8 : f32 to vector<16x16xf32>
    %15 = arith.subf %14, %13 : vector<16x16xf32>
    %cst_9 = arith.constant 0.000000e+00 : f32
    %16 = vector.broadcast %cst_9 : f32 to vector<16x16xf32>
    %17 = arith.maximumf %15, %16 : vector<16x16xf32>
    %18 = math.sqrt %17 : vector<16x16xf32>
    %19 = tpu.iota {dimensions = array<i32: 0>} : vector<16x1xi32>
    %20 = tpu.iota {dimensions = array<i32: 1>} : vector<1x16xi32>
    %cst_10 = arith.constant 0.000000e+00 : f32
    %21 = vector.broadcast %cst_10 : f32 to vector<16x16xf32>
    %c0_i32 = arith.constant 0 : i32
    %c16_i32 = arith.constant 16 : i32
    %22 = arith.addi %c0_i32, %c16_i32 : i32
    %c1_i32 = arith.constant 1 : i32
    %23:2 = scf.for %arg7 = %c0_i32 to %22 step %c1_i32 iter_args(%arg8 = %21, %arg9 = %21) -> (vector<16x16xf32>, vector<16x16xf32>)  : i32 {
      %34 = arith.index_cast %arg7 : i32 to index
      %35 = memref.load %arg1[%34] : memref<16xi32, #tpu.memory_space<smem>>
      %36 = vector.broadcast %arg7 : i32 to vector<16x1xi32>
      %37 = arith.cmpi eq, %19, %36 : vector<16x1xi32>
      %38 = arith.extui %37 : vector<16x1xi1> to vector<16x1xi32>
      %39 = arith.sitofp %38 : vector<16x1xi32> to vector<16x1xf32>
      %40 = vector.broadcast %arg7 : i32 to vector<1x16xi32>
      %41 = arith.cmpi eq, %20, %40 : vector<1x16xi32>
      %42 = arith.extui %41 : vector<1x16xi1> to vector<1x16xi32>
      %43 = arith.sitofp %42 : vector<1x16xi32> to vector<1x16xf32>
      %cst_18 = arith.constant dense<0.000000e+00> : vector<16x1xf32>
      %44 = tpu.matmul %18, %39, %cst_18 {dimension_numbers = #tpu.dot_dimension_numbers<[1], [0], [0], [1], [0, 0, 1, 1], [], []>} : vector<16x16xf32>, vector<16x1xf32>, vector<16x1xf32> -> vector<16x1xf32>
      %cst_19 = arith.constant dense<0.000000e+00> : vector<1x16xf32>
      %45 = tpu.matmul %43, %18, %cst_19 {dimension_numbers = #tpu.dot_dimension_numbers<[1], [0], [0], [1], [0, 0, 1, 1], [], []>} : vector<1x16xf32>, vector<16x16xf32>, vector<1x16xf32> -> vector<1x16xf32>
      %46 = vector.broadcast %35 : i32 to vector<16x1xi32>
      %47 = arith.cmpi eq, %2, %46 : vector<16x1xi32>
      %48 = vector.broadcast %arg7 : i32 to vector<16x1xi32>
      %49 = arith.cmpi ne, %19, %48 : vector<16x1xi32>
      %50 = arith.andi %47, %49 : vector<16x1xi1>
      %51 = vector.broadcast %35 : i32 to vector<1x16xi32>
      %52 = arith.cmpi ne, %1, %51 : vector<1x16xi32>
      %53 = vector.broadcast %45 : vector<1x16xf32> to vector<16x16xf32>
      %54 = vector.broadcast %44 : vector<16x1xf32> to vector<16x16xf32>
      %55 = arith.subf %53, %54 : vector<16x16xf32>
      %56 = vector.broadcast %50 : vector<16x1xi1> to vector<16x16xi1>
      %57 = vector.broadcast %52 : vector<1x16xi1> to vector<16x16xi1>
      %58 = arith.andi %56, %57 : vector<16x16xi1>
      %cst_20 = arith.constant 0.000000e+00 : f32
      %59 = vector.broadcast %cst_20 : f32 to vector<16x16xf32>
      %60 = arith.cmpf ogt, %55, %59 : vector<16x16xf32>
      %61 = arith.andi %58, %60 : vector<16x16xi1>
      %cst_21 = arith.constant 1.000000e-01 : f32
      %62 = vector.broadcast %cst_21 : f32 to vector<16x16xf32>
      %63 = arith.cmpf olt, %55, %62 : vector<16x16xf32>
      %64 = arith.andi %61, %63 : vector<16x16xi1>
      %cst_22 = arith.constant 1.000000e-01 : f32
      %65 = vector.broadcast %cst_22 : f32 to vector<16x16xf32>
      %66 = arith.subf %65, %55 : vector<16x16xf32>
      %cst_23 = arith.constant 0.000000e+00 : f32
      %67 = vector.broadcast %cst_23 : f32 to vector<16x16xf32>
      %68 = arith.select %64, %66, %67 : vector<16x16xi1>, vector<16x16xf32>
      %69 = arith.addf %arg8, %68 : vector<16x16xf32>
      %cst_24 = arith.constant 1.000000e+00 : f32
      %cst_25 = arith.constant 0.000000e+00 : f32
      %70 = vector.broadcast %cst_24 : f32 to vector<16x16xf32>
      %71 = vector.broadcast %cst_25 : f32 to vector<16x16xf32>
      %72 = arith.select %64, %70, %71 : vector<16x16xi1>, vector<16x16xf32>
      %73 = arith.addf %arg9, %72 : vector<16x16xf32>
      scf.yield %69, %73 : vector<16x16xf32>, vector<16x16xf32>
    }
    %c16_i32_11 = arith.constant 16 : i32
    %24 = vector.shape_cast %23#0 : vector<16x16xf32> to vector<1x16x16xf32>
    %cst_12 = arith.constant dense<0.000000e+00> : vector<1xf32>
    %25 = vector.multi_reduction <add>, %24, %cst_12 [1, 2] : vector<1x16x16xf32> to vector<1xf32>
    %26 = vector.shape_cast %25 : vector<1xf32> to vector<1x1x1xf32>
    %27 = vector.extract %26[0, 0, 0] : f32 from vector<1x1x1xf32>
    %c0_13 = arith.constant 0 : index
    %c0_14 = arith.constant 0 : index
    %28 = memref.load %arg5[%c0_13, %c0_14] : memref<1x1xf32, #tpu.memory_space<smem>>
    memref.store %27, %arg5[%c0_13, %c0_14] : memref<1x1xf32, #tpu.memory_space<smem>>
    %29 = vector.shape_cast %23#1 : vector<16x16xf32> to vector<1x16x16xf32>
    %cst_15 = arith.constant dense<0.000000e+00> : vector<1xf32>
    %30 = vector.multi_reduction <add>, %29, %cst_15 [1, 2] : vector<1x16x16xf32> to vector<1xf32>
    %31 = vector.shape_cast %30 : vector<1xf32> to vector<1x1x1xf32>
    %32 = vector.extract %31[0, 0, 0] : f32 from vector<1x1x1xf32>
    %c0_16 = arith.constant 0 : index
    %c0_17 = arith.constant 0 : index
    %33 = memref.load %arg6[%c0_16, %c0_17] : memref<1x1xf32, #tpu.memory_space<smem>>
    memref.store %32, %arg6[%c0_16, %c0_17] : memref<1x1xf32, #tpu.memory_space<smem>>
    return
  }
  func.func @transform_0(%arg0: i32, %arg1: memref<16xi32, #tpu.memory_space<smem>>) -> (i32, i32) {
    %c0_i32 = arith.constant 0 : i32
    %c0_i32_0 = arith.constant 0 : i32
    %c0_i32_1 = arith.constant 0 : i32
    return %c0_i32, %c0_i32_0 : i32, i32
  }
  func.func @transform_1(%arg0: i32, %arg1: memref<16xi32, #tpu.memory_space<smem>>) -> (i32, i32) {
    %c0_i32 = arith.constant 0 : i32
    %c0_i32_0 = arith.constant 0 : i32
    %c0_i32_1 = arith.constant 0 : i32
    return %c0_i32, %c0_i32_0 : i32, i32
  }
  func.func @transform_2(%arg0: i32, %arg1: memref<16xi32, #tpu.memory_space<smem>>) -> (i32, i32) {
    %c0_i32 = arith.constant 0 : i32
    %c0_i32_0 = arith.constant 0 : i32
    %c0_i32_1 = arith.constant 0 : i32
    return %c0_i32, %c0_i32_0 : i32, i32
  }
  func.func @transform_3(%arg0: i32, %arg1: memref<16xi32, #tpu.memory_space<smem>>) -> (i32, i32) {
    %c0_i32 = arith.constant 0 : i32
    %c0_i32_0 = arith.constant 0 : i32
    %c0_i32_1 = arith.constant 0 : i32
    return %c0_i32, %c0_i32_0 : i32, i32
  }
  func.func @transform_4(%arg0: i32, %arg1: memref<16xi32, #tpu.memory_space<smem>>) -> (i32, i32) {
    %c0_i32 = arith.constant 0 : i32
    %c0_i32_0 = arith.constant 0 : i32
    %c0_i32_1 = arith.constant 0 : i32
    return %c0_i32, %c0_i32_0 : i32, i32
  }
}

</mosaic_0001>

<llo_original>
// kernel: tpu_custom_call.1
$region0: #{tpu_custom_call.1}
  #allocation0 [shape = 'u32[]', space=smem, size = 0x4, offset = 0x4, fixed_abs, tag = 'smem constant byte address 0x4 - core index']
  #allocation1 [shape = 'u32[144,128]{1,0:T(1,128)}', space=vmem, size = 0x12000, scoped, tag = 'internal scratch']
  #allocation2 [shape = 's32[1]{0}', space=sflag, size = 0x4, scoped, tag = 'scoped memory for tpu_custom_call.1']
  #allocation3 [shape = 'u8[512]{0}', space=smem, size = 0x200, scoped, tag = 'prefetched SMEM operand 0']
  %s0 = inlined_call_operand.vmem [shape: s32[16], index: 0, kind: input, shape index: {}]
  %s1 = inlined_call_operand.vmem [shape: f32[16,32], index: 1, kind: input, shape index: {}]
  %s2 = inlined_call_operand.vmem [shape: s32[1,16], index: 2, kind: input, shape index: {}]
  %s3 = inlined_call_operand.vmem [shape: s32[16,1], index: 3, kind: input, shape index: {}]
  %s4 = inlined_call_operand.hbm [shape: f32[1,1], index: 4, kind: output, shape index: {0}]
  %s5 = inlined_call_operand.hbm [shape: f32[1,1], index: 5, kind: output, shape index: {1}]
  %6 = xla_tuple %s4, %s5
  %s7 = sld [smem:[#allocation0]]
  $region37: #{tpu_custom_call.1} parent=0
    _
  %s9 = ssub.s32 1, %s7
  %s10 = scalar_select 0, %s9, %s7
  %s11 = sshll.u32 %s0, 4
  %s12 = int_to_ptr.vmem [resolvable:$true] %s11
  %14 = dma.vmem_to_smem %s12, 16, [#allocation3], [#allocation2]
  %15 = dma.done [#allocation2], 16
  %16 = sfence
  $region1: #{tpu_custom_call.1} parent=0
    #allocation4 [shape = 'u8[512]{0}', space=smem, size = 0x200, scoped, tag = 'output window, operand 0, single buffered']
    #allocation5 [shape = 's32[1]{0}', space=sflag, size = 0x4, scoped, tag = 'scoped memory for tpu_custom_call.1']
    #allocation6 [shape = 'u8[512]{0}', space=smem, size = 0x200, scoped, tag = 'output window, operand 1, single buffered']
    #allocation7 [shape = 's32[1]{0}', space=sflag, size = 0x4, scoped, tag = 'scoped memory for tpu_custom_call.1']
    %17 = vsyncpa [#allocation5], 0
    %18 = vsyncpa [#allocation7], 0
    // Predicated region
    $region2: #{tpu_custom_call.1} parent=1 // pred_check
      _
    $region3: #{tpu_custom_call.1} parent=1 // pred_check_branch
      %20 = sbr.rel (0) target = $region5
    $region4: #{tpu_custom_call.1} parent=1 // pred_region
      _
    $region5: #{tpu_custom_call.1} parent=1 // pred_fallthru
      _
    // Predicated region
    $region6: #{tpu_custom_call.1} parent=1 // pred_check
      _
    $region7: #{tpu_custom_call.1} parent=1 // pred_check_branch
      %22 = sbr.rel (0) target = $region9
    $region8: #{tpu_custom_call.1} parent=1 // pred_region
      _
    $region9: #{tpu_custom_call.1} parent=1 // pred_fallthru
      _
    // Predicated region
    $region10: #{tpu_custom_call.1} parent=1 // pred_check
      _
    $region11: #{tpu_custom_call.1} parent=1 // pred_check_branch
      %24 = sbr.rel (0) target = $region13
    $region12: #{tpu_custom_call.1} parent=1 // pred_region
      _
    $region13: #{tpu_custom_call.1} parent=1 // pred_fallthru
      _
    %v25 = vld [vmem:[%s1] sm:$0xff]
    %v26 = vld [vmem:[%s1 + $0x8] sm:$0xff]
    %v27 = vld [vmem:[%s2] sm:$0x1]
    %v28 = vld [vmem:[%s3] sm:$0xff]
    %v29 = vld [vmem:[%s3 + $0x8] sm:$0xff]
    %v30 = vmul.f32 %v25, %v25
    %v31 = vmul.f32 %v26, %v26
    %vm32 = vcmask 261120
    %v33 = vsel %vm32, %v30, 0.0
    %34 = vadd.xlane.f32.xlu0 %v33
    %v35 = vpop.xlane.xlu0 %34
    %v36 = vsel %vm32, %v31, 0.0
    %37 = vadd.xlane.f32.xlu0 %v36
    %v38 = vpop.xlane.xlu0 %37
    %v39 = vmax.f32 %v35, 1e-24
    %v40 = vmax.f32 %v38, 1e-24
    %v41 = vrsqrt.pop %v39
    %v42 = vrsqrt.pop %v40
    %v43 = vmul.f32 %v25, %v41
    %v44 = vmul.f32 %v26, %v42
    %v46 = vsel %vm32, %v43, 0
    %v49 = vsel %vm32, %v44, 0
    %51 = vmatprep.subr.mxu0 0.0
    %52 = vmatpush1.xpose.msra.mxu0 %v46
    %53 = vmatprep.subr.mxu0 0.0
    %54 = vmatpush1.xpose.msra.mxu0 %v49
    %55 = vmatprep.subr.mxu0 0.0
    %56 = vmatpush1.xpose.msra.mxu0 0.0
    %57 = vmatprep.subr.mxu0 0.0
    %58 = vmatpush1.xpose.msra.mxu0 0.0
    %59 = vmatprep.subr.mxu0 0.0
    %60 = vmatpush1.xpose.msra.mxu0 0.0
    %61 = vmatprep.subr.mxu0 0.0
    %62 = vmatpush1.xpose.msra.mxu0 0.0
    %63 = vmatprep.subr.mxu0 0.0
    %64 = vmatpush1.xpose.msra.mxu0 0.0
    %65 = vmatprep.subr.mxu0 0.0
    %66 = vmatpush1.xpose.msra.mxu0 0.0
    %67 = vmatprep.subr.mxu0 0.0
    %68 = vmatpush1.xpose.msra.mxu0 0.0
    %69 = vmatprep.subr.mxu0 0.0
    %70 = vmatpush1.xpose.msra.mxu0 0.0
    %71 = vmatprep.subr.mxu0 0.0
    %72 = vmatpush1.xpose.msra.mxu0 0.0
    %73 = vmatprep.subr.mxu0 0.0
    %74 = vmatpush1.xpose.msra.mxu0 0.0
    %75 = vmatprep.subr.mxu0 0.0
    %76 = vmatpush1.xpose.msra.mxu0 0.0
    %77 = vmatprep.subr.mxu0 0.0
    %78 = vmatpush1.xpose.msra.mxu0 0.0
    %79 = vmatprep.subr.mxu0 0.0
    %80 = vmatpush1.xpose.msra.mxu0 0.0
    %81 = vmatprep.subr.mxu0 0.0
    %82 = vmatpush1.xpose.msra.mxu0 0.0
    %83 = vmatprep.subr.mxu0 0.0
    %84 = vmatpush1.xpose.msra.mxu0 0.0
    %85 = vmatprep.subr.mxu0 0.0
    %86 = vmatpush1.xpose.msra.mxu0 0.0
    %87 = vmatprep.subr.mxu0 0.0
    %88 = vmatpush1.xpose.msra.mxu0 0.0
    %89 = vmatprep.subr.mxu0 0.0
    %90 = vmatpush1.xpose.msra.mxu0 0.0
    %91 = vmatprep.subr.mxu0 0.0
    %92 = vmatpush1.xpose.msra.mxu0 0.0
    %93 = vmatprep.subr.mxu0 0.0
    %94 = vmatpush1.xpose.msra.mxu0 0.0
    %95 = vmatprep.subr.mxu0 0.0
    %96 = vmatpush1.xpose.msra.mxu0 0.0
    %97 = vmatprep.subr.mxu0 0.0
    %98 = vmatpush1.xpose.msra.mxu0 0.0
    %99 = vmatprep.subr.mxu0 0.0
    %100 = vmatpush1.xpose.msra.mxu0 0.0
    %101 = vmatprep.subr.mxu0 0.0
    %102 = vmatpush1.xpose.msra.mxu0 0.0
    %103 = vmatprep.subr.mxu0 0.0
    %104 = vmatpush1.xpose.msra.mxu0 0.0
    %105 = vmatprep.subr.mxu0 0.0
    %106 = vmatpush1.xpose.msra.mxu0 0.0
    %107 = vmatprep.subr.mxu0 0.0
    %108 = vmatpush1.xpose.msra.mxu0 0.0
    %109 = vmatprep.subr.mxu0 0.0
    %110 = vmatpush1.xpose.msra.mxu0 0.0
    %111 = vmatprep.subr.mxu0 0.0
    %112 = vmatpush1.xpose.msra.mxu0 0.0
    %113 = vmatprep.subr.mxu0 0.0
    %114 = vmatpush1.xpose.msra.mxu0 0.0
    %115 = vmatprep.mubr.f32.mxu0 0.0
    %116 = vmatmul.mubr.f32.gmra.mrb[0].mxu0 %v46
    %v117 = vpop.f32.mrb[0].mxu0
    %v118 = vadd.f32 0.0, %v117
    %v119 = vpop.f32.mrb[0].mxu0
    %120 = vmatprep.mubr.f32.mxu0 0.0
    %121 = vmatmul.mubr.f32.gmra.mrb[0].mxu0 %v49
    %v122 = vpop.f32.mrb[0].mxu0
    %v123 = vadd.f32 0.0, %v122
    %v124 = vpop.f32.mrb[0].mxu0
    %125 = vdwg.mxu0
    %v126 = vmul.f32 %v118, 2.0
    %v127 = vmul.f32 %v123, 2.0
    %v128 = vsub.f32 2.0, %v126
    %v129 = vsub.f32 2.0, %v127
    %v130 = vmax.f32 %v128, 0.0
    %v131 = vmax.f32 %v129, 0.0
    %v132 = vrsqrt.pop %v130
    %v133 = vmul.f32 %v130, %v132
    %vm134 = vcmp.eq.f32.partialorder %v130, inf
    %v135 = vsel %vm134, %v130, %v133
    %vm136 = vcmp.eq.f32.partialorder %v130, 0.0
    %v137 = vand.u32 %v130, 2147483648
    %v138 = vsel %vm136, %v137, %v135
    %v139 = vrsqrt.pop %v131
    %v140 = vmul.f32 %v131, %v139
    %vm141 = vcmp.eq.f32.partialorder %v131, inf
    %v142 = vsel %vm141, %v131, %v140
    %vm143 = vcmp.eq.f32.partialorder %v131, 0.0
    %v144 = vand.u32 %v131, 2147483648
    %v145 = vsel %vm143, %v144, %v142
    %v146 = vlaneseq
    %v147 = vshrl.u32 %v146, 7
    %v148 = vadd.s32 %v147, 8
    %v149 = vlaneseq
    %v150 = vand.u32 %v149, 127
    loop: start=0, step=1, limit=16
    $region14: #{tpu_custom_call.1} parent=1 // loop_pre_header
      _
    $region15: #{tpu_custom_call.1} parent=1 // loop_header
      %s152 = sphi 0, %s156
      %p153 = scmp.ge.s32.totalorder %s152, 16
      %v157 = vphi 0.0, %v381
      %v158 = vphi 0.0, %v382
      %v159 = vphi 0.0, %v385
      %v160 = vphi 0.0, %v386
    $region16: #{tpu_custom_call.1} parent=1 // loop_header_branch
      %155 = sbr.rel (%p153) target = $region20
    $region17: #{tpu_custom_call.1} parent=1 // loop_body
      %s161 = sld [smem:[#allocation3 + %s152]]
      %v162 = vstv %s152
      %vm163 = vcmp.eq.s32.totalorder %v147, %v162
      %vm164 = vcmp.eq.s32.totalorder %v148, %v162
      %v165 = vsel %vm163, 1, 0
      %v166 = vsel %vm164, 1, 0
      %v167 = vcvt.s32.f32 %v165
      %v168 = vcvt.s32.f32 %v166
      %vm169 = vcmp.eq.s32.totalorder %v150, %v162
      %v170 = vsel %vm169, 1, 0
      %v171 = vcvt.s32.f32 %v170
      %vm172 = vcmask 130048
      %v174 = vsel %vm172, %v138, 0
      %v177 = vsel %vm172, %v145, 0
      %179 = vmatprep.subr.mxu0 0.0
      %180 = vmatpush1.msra.mxu0 %v167
      %181 = vmatprep.subr.mxu0 0.0
      %182 = vmatpush1.msra.mxu0 %v168
      %183 = vmatprep.subr.mxu0 0.0
      %184 = vmatpush1.msra.mxu0 0.0
      %185 = vmatprep.subr.mxu0 0.0
      %186 = vmatpush1.msra.mxu0 0.0
      %187 = vmatprep.subr.mxu0 0.0
      %188 = vmatpush1.msra.mxu0 0.0
      %189 = vmatprep.subr.mxu0 0.0
      %190 = vmatpush1.msra.mxu0 0.0
      %191 = vmatprep.subr.mxu0 0.0
      %192 = vmatpush1.msra.mxu0 0.0
      %193 = vmatprep.subr.mxu0 0.0
      %194 = vmatpush1.msra.mxu0 0.0
      %195 = vmatprep.subr.mxu0 0.0
      %196 = vmatpush1.msra.mxu0 0.0
      %197 = vmatprep.subr.mxu0 0.0
      %198 = vmatpush1.msra.mxu0 0.0
      %199 = vmatprep.subr.mxu0 0.0
      %200 = vmatpush1.msra.mxu0 0.0
      %201 = vmatprep.subr.mxu0 0.0
      %202 = vmatpush1.msra.mxu0 0.0
      %203 = vmatprep.subr.mxu0 0.0
      %204 = vmatpush1.msra.mxu0 0.0
      %205 = vmatprep.subr.mxu0 0.0
      %206 = vmatpush1.msra.mxu0 0.0
      %207 = vmatprep.subr.mxu0 0.0
      %208 = vmatpush1.msra.mxu0 0.0
      %209 = vmatprep.subr.mxu0 0.0
      %210 = vmatpush1.msra.mxu0 0.0
      %211 = vmatprep.subr.mxu0 0.0
      %212 = vmatpush1.msra.mxu0 0.0
      %213 = vmatprep.subr.mxu0 0.0
      %214 = vmatpush1.msra.mxu0 0.0
      %215 = vmatprep.subr.mxu0 0.0
      %216 = vmatpush1.msra.mxu0 0.0
      %217 = vmatprep.subr.mxu0 0.0
      %218 = vmatpush1.msra.mxu0 0.0
      %219 = vmatprep.subr.mxu0 0.0
      %220 = vmatpush1.msra.mxu0 0.0
      %221 = vmatprep.subr.mxu0 0.0
      %222 = vmatpush1.msra.mxu0 0.0
      %223 = vmatprep.subr.mxu0 0.0
      %224 = vmatpush1.msra.mxu0 0.0
      %225 = vmatprep.subr.mxu0 0.0
      %226 = vmatpush1.msra.mxu0 0.0
      %227 = vmatprep.subr.mxu0 0.0
      %228 = vmatpush1.msra.mxu0 0.0
      %229 = vmatprep.subr.mxu0 0.0
      %230 = vmatpush1.msra.mxu0 0.0
      %231 = vmatprep.subr.mxu0 0.0
      %232 = vmatpush1.msra.mxu0 0.0
      %233 = vmatprep.subr.mxu0 0.0
      %234 = vmatpush1.msra.mxu0 0.0
      %235 = vmatprep.subr.mxu0 0.0
      %236 = vmatpush1.msra.mxu0 0.0
      %237 = vmatprep.subr.mxu0 0.0
      %238 = vmatpush1.msra.mxu0 0.0
      %239 = vmatprep.subr.mxu0 0.0
      %240 = vmatpush1.msra.mxu0 0.0
      %241 = vmatprep.subr.mxu0 0.0
      %242 = vmatpush1.msra.mxu0 0.0
      %243 = vmatprep.mubr.f32.mxu0 0.0
      %244 = vmatmul.mubr.f32.gmra.mrb[0].mxu0 %v174
      %v245 = vpop.f32.mrb[0].mxu0
      %v246 = vadd.f32 0.0, %v245
      %v247 = vpop.f32.mrb[0].mxu0
      %248 = vmatprep.mubr.f32.mxu0 0.0
      %249 = vmatmul.mubr.f32.gmra.mrb[0].mxu0 %v177
      %v250 = vpop.f32.mrb[0].mxu0
      %v251 = vadd.f32 0.0, %v250
      %v252 = vpop.f32.mrb[0].mxu0
      %253 = vdwg.mxu0
      %v255 = vsel %vm172, %v171, 0
      %257 = vmatprep.subr.mxu0 0.0
      %258 = vmatpush1.msra.mxu0 %v138
      %259 = vmatprep.subr.mxu0 0.0
      %260 = vmatpush1.msra.mxu0 %v145
      %261 = vmatprep.subr.mxu0 0.0
      %262 = vmatpush1.msra.mxu0 0.0
      %263 = vmatprep.subr.mxu0 0.0
      %264 = vmatpush1.msra.mxu0 0.0
      %265 = vmatprep.subr.mxu0 0.0
      %266 = vmatpush1.msra.mxu0 0.0
      %267 = vmatprep.subr.mxu0 0.0
      %268 = vmatpush1.msra.mxu0 0.0
      %269 = vmatprep.subr.mxu0 0.0
      %270 = vmatpush1.msra.mxu0 0.0
      %271 = vmatprep.subr.mxu0 0.0
      %272 = vmatpush1.msra.mxu0 0.0
      %273 = vmatprep.subr.mxu0 0.0
      %274 = vmatpush1.msra.mxu0 0.0
      %275 = vmatprep.subr.mxu0 0.0
      %276 = vmatpush1.msra.mxu0 0.0
      %277 = vmatprep.subr.mxu0 0.0
      %278 = vmatpush1.msra.mxu0 0.0
      %279 = vmatprep.subr.mxu0 0.0
      %280 = vmatpush1.msra.mxu0 0.0
      %281 = vmatprep.subr.mxu0 0.0
      %282 = vmatpush1.msra.mxu0 0.0
      %283 = vmatprep.subr.mxu0 0.0
      %284 = vmatpush1.msra.mxu0 0.0
      %285 = vmatprep.subr.mxu0 0.0
      %286 = vmatpush1.msra.mxu0 0.0
      %287 = vmatprep.subr.mxu0 0.0
      %288 = vmatpush1.msra.mxu0 0.0
      %289 = vmatprep.subr.mxu0 0.0
      %290 = vmatpush1.msra.mxu0 0.0
      %291 = vmatprep.subr.mxu0 0.0
      %292 = vmatpush1.msra.mxu0 0.0
      %293 = vmatprep.subr.mxu0 0.0
      %294 = vmatpush1.msra.mxu0 0.0
      %295 = vmatprep.subr.mxu0 0.0
      %296 = vmatpush1.msra.mxu0 0.0
      %297 = vmatprep.subr.mxu0 0.0
      %298 = vmatpush1.msra.mxu0 0.0
      %299 = vmatprep.subr.mxu0 0.0
      %300 = vmatpush1.msra.mxu0 0.0
      %301 = vmatprep.subr.mxu0 0.0
      %302 = vmatpush1.msra.mxu0 0.0
      %303 = vmatprep.subr.mxu0 0.0
      %304 = vmatpush1.msra.mxu0 0.0
      %305 = vmatprep.subr.mxu0 0.0
      %306 = vmatpush1.msra.mxu0 0.0
      %307 = vmatprep.subr.mxu0 0.0
      %308 = vmatpush1.msra.mxu0 0.0
      %309 = vmatprep.subr.mxu0 0.0
      %310 = vmatpush1.msra.mxu0 0.0
      %311 = vmatprep.subr.mxu0 0.0
      %312 = vmatpush1.msra.mxu0 0.0
      %313 = vmatprep.subr.mxu0 0.0
      %314 = vmatpush1.msra.mxu0 0.0
      %315 = vmatprep.subr.mxu0 0.0
      %316 = vmatpush1.msra.mxu0 0.0
      %317 = vmatprep.subr.mxu0 0.0
      %318 = vmatpush1.msra.mxu0 0.0
      %319 = vmatprep.subr.mxu0 0.0
      %320 = vmatpush1.msra.mxu0 0.0
      %321 = vmatprep.mubr.f32.mxu0 0.0
      %322 = vmatmul.mubr.f32.gmra.mrb[0].mxu0 %v255
      %v323 = vpop.f32.mrb[0].mxu0
      %v324 = vadd.f32 0.0, %v323
      %v325 = vpop.f32.mrb[0].mxu0
      %326 = vdwg.mxu0
      %v327 = vstv %s161
      %vm328 = vcmp.eq.s32.totalorder %v28, %v327
      %vm329 = vcmp.eq.s32.totalorder %v29, %v327
      %vm330 = vcmp.ne.s32.totalorder %v147, %v162
      %vm331 = vcmp.ne.s32.totalorder %v148, %v162
      %vm332 = vmand %vm328, %vm330
      %vm333 = vmand %vm329, %vm331
      %vm334 = vcmp.ne.s32.totalorder %v27, %v327
      %v335 = vlaneseq
      %v336 = vshrl.u32 %v335, 7
      %v337 = vsub.s32 0, %v336
      %v338 = vrot.slane %v324, %v337
      %340 = vset.pattern.permute.xlu0 0
      %341 = vperm.xlu0 %340, %v246
      %v342 = vpop.permute.xlu0 %341
      %345 = vset.pattern.permute.xlu0 0
      %346 = vperm.xlu0 %345, %v251
      %v347 = vpop.permute.xlu0 %346
      %v349 = vsub.f32 %v338, %v342
      %v350 = vsub.f32 %v338, %v347
      %v351 = vsel %vm332, 1, 0
      %v352 = vsel %vm333, 1, 0
      %353 = vset.pattern.permute.xlu0 0
      %354 = vperm.xlu0 %353, %v351
      %v355 = vpop.permute.xlu0 %354
      %356 = vset.pattern.permute.xlu0 0
      %357 = vperm.xlu0 %356, %v352
      %v358 = vpop.permute.xlu0 %357
      %vm359 = vcmp.eq.s32.totalorder %v355, 1
      %vm360 = vcmp.eq.s32.totalorder %v358, 1
      %v361 = vsel %vm334, 1, 0
      %v362 = vlaneseq
      %v363 = vshrl.u32 %v362, 7
      %v364 = vsub.s32 0, %v363
      %v365 = vrot.slane %v361, %v364
      %vm366 = vcmp.eq.s32.totalorder %v365, 1
      %vm367 = vmand %vm359, %vm366
      %vm368 = vmand %vm360, %vm366
      %vm369 = vcmp.gt.f32.partialorder %v349, 0.0
      %vm370 = vcmp.gt.f32.partialorder %v350, 0.0
      %vm371 = vmand %vm367, %vm369
      %vm372 = vmand %vm368, %vm370
      %vm373 = vcmp.lt.f32.partialorder %v349, 0.1
      %vm374 = vcmp.lt.f32.partialorder %v350, 0.1
      %vm375 = vmand %vm371, %vm373
      %vm376 = vmand %vm372, %vm374
      %v377 = vsub.f32 0.1, %v349
      %v378 = vsub.f32 0.1, %v350
      %v379 = vsel %vm375, %v377, 0.0
      %v380 = vsel %vm376, %v378, 0.0
      %v381 = vadd.f32 %v157, %v379
      %v382 = vadd.f32 %v158, %v380
      %v383 = vsel %vm375, 1.0, 0.0
      %v384 = vsel %vm376, 1.0, 0.0
      %v385 = vadd.f32 %v159, %v383
      %v386 = vadd.f32 %v160, %v384
    $region18: #{tpu_custom_call.1} parent=1 // loop_footer
      %s156 = sadd.s32 1, %s152
    $region19: #{tpu_custom_call.1} parent=1 // loop_footer_branch
      %151 = sbr.rel target = $region15
    $region20: #{tpu_custom_call.1} parent=1 // loop_exit
      _
    %vm387 = vcmask 130048
    %v388 = vsel %vm387, %v157, 0.0
    %v389 = vsel %vm387, %v158, 0.0
    %v390 = vadd.f32 %v388, %v389
    %391 = vadd.xlane.f32.xlu0 %v390
    %v392 = vpop.xlane.xlu0 %391
    %v393 = vrot.slane %v392, 4
    %v394 = vadd.f32 %v392, %v393
    %v395 = vrot.slane %v394, 2
    %v396 = vadd.f32 %v394, %v395
    %v397 = vrot.slane %v396, 1
    %v398 = vadd.f32 %v396, %v397
    %s399 = vtos %v398
    %s400 = scalar_lea.smem [#allocation4], 0
    %401 = sst [smem:[%s400]] %s399
    %v402 = vsel %vm387, %v159, 0.0
    %v403 = vsel %vm387, %v160, 0.0
    %v404 = vadd.f32 %v402, %v403
    %405 = vadd.xlane.f32.xlu0 %v404
    %v406 = vpop.xlane.xlu0 %405
    %v407 = vrot.slane %v406, 4
    %v408 = vadd.f32 %v406, %v407
    %v409 = vrot.slane %v408, 2
    %v410 = vadd.f32 %v408, %v409
    %v411 = vrot.slane %v410, 1
    %v412 = vadd.f32 %v410, %v411
    %s413 = vtos %v412
    %s414 = scalar_lea.smem [#allocation6], 0
    %415 = sst [smem:[%s414]] %s413
    // Predicated region
    $region21: #{tpu_custom_call.1} parent=1 // pred_check
      _
    $region22: #{tpu_custom_call.1} parent=1 // pred_check_branch
      %417 = sbr.rel (0) target = $region24
    $region23: #{tpu_custom_call.1} parent=1 // pred_region
      %s419 = ssub.s32 16, 16
      %420 = vsyncadd [#allocation5], %s419
      %423 = dma.smem_to_hbm [#allocation4], 16, %s4, [#allocation5]
    $region24: #{tpu_custom_call.1} parent=1 // pred_fallthru
      _
    // Predicated region
    $region25: #{tpu_custom_call.1} parent=1 // pred_check
      _
    $region26: #{tpu_custom_call.1} parent=1 // pred_check_branch
      %425 = sbr.rel (0) target = $region28
    $region27: #{tpu_custom_call.1} parent=1 // pred_region
      %s427 = ssub.s32 16, 16
      %428 = vsyncadd [#allocation7], %s427
      %431 = dma.smem_to_hbm [#allocation6], 16, %s5, [#allocation7]
    $region28: #{tpu_custom_call.1} parent=1 // pred_fallthru
      _
    // Predicated region
    $region29: #{tpu_custom_call.1} parent=1 // pred_check
      _
    $region30: #{tpu_custom_call.1} parent=1 // pred_check_branch
      %433 = sbr.rel (0) target = $region32
    $region31: #{tpu_custom_call.1} parent=1 // pred_region
      %434 = dma.done [#allocation5], 16
    $region32: #{tpu_custom_call.1} parent=1 // pred_fallthru
      _
    // Predicated region
    $region33: #{tpu_custom_call.1} parent=1 // pred_check
      _
    $region34: #{tpu_custom_call.1} parent=1 // pred_check_branch
      %436 = sbr.rel (0) target = $region36
    $region35: #{tpu_custom_call.1} parent=1 // pred_region
      %437 = dma.done [#allocation7], 16
    $region36: #{tpu_custom_call.1} parent=1 // pred_fallthru
      _
    %438 = sfence
    %439 = vsyncpa [#allocation5], 1
    %440 = vsyncpa [#allocation7], 1

</llo_original>
